<compile_context>
chip_gen: v7x
topology: tpu7x:2x2x1
jax: 0.10.0
libtpu: 0.0.40
codegen_flags: <defaults>
</compile_context>

<pallas_src>
import functools

import jax
import jax.numpy as jnp
import numpy as np
from jax.experimental import pallas as pl
from jax.experimental.pallas import tpu as pltpu


def _round_up(x, m):
    return ((x + m - 1) // m) * m


def _conv_block_kernel(x_ref, w1_ref, b1_ref, w2_ref, b2_ref, o_ref,
                       xpad_ref, hpad_ref, *, pad, lead):
    """One grid step = Bt whole sequences.

    x_ref   : (Bt, L, D)             unpadded input sequences (original dtype)
    w1_ref  : (K*Dp, Dp)  mm_dtype   conv1 weights, im2col-stacked (tap-major)
    b1_ref  : (1, Dp)     f32        conv1 bias (zero-padded channels)
    w2_ref  : (K*Dp, Dp)  mm_dtype   conv2 weights
    b2_ref  : (1, Dp)     f32        conv2 bias
    o_ref   : (Bt, L, D)             output
    xpad_ref: (Bt, lead+L+pad, Dp)   VMEM scratch, zero-padded input
    hpad_ref: (Bt, lead+L+pad, Dp)   VMEM scratch, zero-padded hidden act
    """
    Bt, L, D = x_ref.shape
    Dp = xpad_ref.shape[-1]
    K = w1_ref.shape[0] // Dp
    M = Bt * L
    base = lead - pad                      # first row read by tap k=0
    mm_dtype = xpad_ref.dtype

    # --- Zero only the halo rows (body rows are fully overwritten below). ---
    if pad > 0:
        zh = jnp.zeros((Bt, pad, Dp), dtype=mm_dtype)
        xpad_ref[:, lead - pad:lead, :] = zh
        xpad_ref[:, lead + L:lead + L + pad, :] = zh
        hpad_ref[:, lead - pad:lead, :] = zh
        hpad_ref[:, lead + L:lead + L + pad, :] = zh

    # --- Stage the input block, lane-padded to Dp, as one dense store. ------
    xb = x_ref[...].astype(mm_dtype)
    if Dp != D:
        xb = jnp.concatenate(
            [xb, jnp.zeros((Bt, L, Dp - D), dtype=mm_dtype)], axis=-1)
    xpad_ref[:, lead:lead + L, :] = xb

    def conv_relu(src_ref, w_ref, b_ref):
        # im2col slab (M, K*Dp): K shifted views of the padded scratch,
        # concatenated along lanes -> ONE fused MXU matmul per conv.
        taps = [src_ref[:, base + k:base + k + L, :].reshape(M, Dp)
                for k in range(K)]
        slab = taps[0] if K == 1 else jnp.concatenate(taps, axis=-1)
        acc = jnp.dot(slab, w_ref[...], preferred_element_type=jnp.float32)
        # Bias added once at the end; ReLU in f32 on the VPU (v5e-friendly).
        return jnp.maximum(acc + b_ref[...], 0.0)

    # --- Conv1d #1 + ReLU, stage hidden into second padded scratch. ---------
    h = conv_relu(xpad_ref, w1_ref, b1_ref)
    # Note: in the bf16 path the hidden activation is rounded to bf16 here
    # before the second conv (intentional; f32 accumulation inside each conv).
    hpad_ref[:, lead:lead + L, :] = h.astype(mm_dtype).reshape(Bt, L, Dp)

    # --- Conv1d #2 + ReLU, drop the lane padding on the way out. ------------
    y = conv_relu(hpad_ref, w2_ref, b2_ref)
    o_ref[...] = y[:, :D].astype(o_ref.dtype).reshape(Bt, L, D)


def _plan_tiles(B, L, D, Dp, Lp, K, x_isz, out_isz, mm_isz,
                budget_bytes=44 << 20):
    """Pick Bt (divisor of B) and a VMEM limit.

    Targets a ~44 MiB footprint (safe for v7x's 64 MiB VMEM) and prefers a
    grid with >= 2 steps so both v7x TensorCores / megacore partitions get
    work.  Footprint model: double-buffered in/out tiles + the two padded
    scratches + im2col slab / f32 accumulator temporaries + resident weights.
    """
    per_seq = (2 * L * D * (x_isz + out_isz)       # in + out, double-buffered
               + 2 * Lp * Dp * mm_isz              # two padded scratches
               + L * K * Dp * mm_isz               # im2col slab temporary
               + 2 * L * Dp * 4)                   # f32 accumulators (approx)
    w_bytes = 2 * 2 * K * Dp * Dp * mm_isz + 2 * 2 * Dp * 4   # w1,w2,b1,b2 (x2 bufs)

    divisors = [d for d in range(1, B + 1) if B % d == 0]
    fitting = [d for d in divisors if d * per_seq + w_bytes <= budget_bytes] or [1]
    multi = [d for d in fitting if B // d >= 2]    # >= 2 grid steps when possible
    bt = max(multi) if multi else max(fitting)

    est = bt * per_seq + w_bytes
    vmem_limit = int(min(max(est + (4 << 20), 32 << 20), 112 << 20))
    return bt, vmem_limit


def _prep_weight(w, Dp, dtype):
    """torch Conv1d weight (Cout, Cin, K) -> im2col-stacked (K*Dp, Dp)."""
    Cout, Cin, K = w.shape
    wt = jnp.transpose(w, (2, 1, 0))                       # (K, Cin, Cout)
    wt = jnp.pad(wt, ((0, 0), (0, Dp - Cin), (0, Dp - Cout)))
    return wt.reshape(K * Dp, Dp).astype(dtype)


def _prep_bias(b, Dp):
    D = b.shape[0]
    return jnp.pad(b, (0, Dp - D)).reshape(1, Dp).astype(jnp.float32)


@functools.partial(jax.jit,
                   static_argnames=("kernel_size", "matmul_dtype", "out_dtype"))
def simple_conv_block(x, w1, b1, w2, b2, *, kernel_size=3,
                      matmul_dtype=jnp.bfloat16, out_dtype=None):
    """x: (B, L, D). w*: (D, D, K) torch Conv1d weights. b*: (D,).

    matmul_dtype: MXU input dtype (bf16 recommended on v5e/v6e/v7x; the MXU is
    bf16-native on all three and bias/ReLU stay in f32).  Accumulation is f32.
    out_dtype: output dtype (default: x.dtype); pass bf16 to halve writeback.
    """
    B, L, D = x.shape
    K = kernel_size
    if K % 2 != 1:
        # torch Conv1d with padding=K//2 only gives "same" length for odd K.
        raise ValueError("simple_conv_block assumes odd kernel_size")
    pad = K // 2
    out_dtype = x.dtype if out_dtype is None else out_dtype

    mm_isz = jnp.dtype(matmul_dtype).itemsize
    # Sublane packing: 8 rows per vreg tile at 32-bit, 16 at 16-bit, 32 at 8-bit.
    packing = 8 * (4 // mm_isz)
    lead = _round_up(pad, packing) if pad > 0 else 0
    Lp = lead + L + pad
    Dp = _round_up(D, 128)                 # lane-dense channel dimension

    Bt, vmem_limit = _plan_tiles(
        B, L, D, Dp, Lp, K,
        x_isz=jnp.dtype(x.dtype).itemsize,
        out_isz=jnp.dtype(out_dtype).itemsize,
        mm_isz=mm_isz)
    grid = (B // Bt,)

    # Wrapper glue touches only the tiny weight/bias tensors; x is DMA'd
    # unpadded and un-cast (cast + channel pad happen in VMEM inside the kernel).
    w1_s = _prep_weight(w1, Dp, matmul_dtype)
    w2_s = _prep_weight(w2, Dp, matmul_dtype)
    b1_s = _prep_bias(b1, Dp)
    b2_s = _prep_bias(b2, Dp)

    kernel = functools.partial(_conv_block_kernel, pad=pad, lead=lead)

    return pl.pallas_call(
        kernel,
        out_shape=jax.ShapeDtypeStruct((B, L, D), out_dtype),
        grid_spec=pltpu.PrefetchScalarGridSpec(
            num_scalar_prefetch=0,
            grid=grid,
            in_specs=[
                pl.BlockSpec((Bt, L, D), lambda b: (b, 0, 0)),     # x
                pl.BlockSpec((K * Dp, Dp), lambda b: (0, 0)),      # w1 (resident)
                pl.BlockSpec((1, Dp), lambda b: (0, 0)),           # b1
                pl.BlockSpec((K * Dp, Dp), lambda b: (0, 0)),      # w2 (resident)
                pl.BlockSpec((1, Dp), lambda b: (0, 0)),           # b2
            ],
            out_specs=pl.BlockSpec((Bt, L, D), lambda b: (b, 0, 0)),
            scratch_shapes=[
                pltpu.VMEM((Bt, Lp, Dp), matmul_dtype),   # padded input
                pltpu.VMEM((Bt, Lp, Dp), matmul_dtype),   # padded hidden
            ],
        ),
        compiler_params=pltpu.CompilerParams(
            dimension_semantics=("parallel",),
            vmem_limit_bytes=vmem_limit),
    )(x, w1_s, b1_s, w2_s, b2_s)


def _reference(x, w1, b1, w2, b2):
    """Independent pure-JAX reference matching torch.nn.Conv1d semantics."""
    pad = w1.shape[-1] // 2
    xc = jnp.transpose(x, (0, 2, 1))  # (B, D, L)  == x.permute(0, 2, 1)

    def conv(x_ncl, w, b):
        y = jax.lax.conv_general_dilated(
            x_ncl, w, window_strides=(1,), padding=((pad, pad),),
            dimension_numbers=("NCH", "OIH", "NCH"))
        return y + b[None, :, None]

    h = jax.nn.relu(conv(xc, w1, b1))
    y = jax.nn.relu(conv(h, w2, b2))
    return jnp.transpose(y, (0, 2, 1))


def _make_params(key, D, K):
    k1, k2, k3, k4 = jax.random.split(key, 4)
    scale = 1.0 / np.sqrt(D * K)
    w1 = jax.random.uniform(k1, (D, D, K), jnp.float32, -scale, scale)
    b1 = jax.random.uniform(k2, (D,), jnp.float32, -scale, scale)
    w2 = jax.random.uniform(k3, (D, D, K), jnp.float32, -scale, scale)
    b2 = jax.random.uniform(k4, (D,), jnp.float32, -scale, scale)
    return w1, b1, w2, b2


if __name__ == "__main__":
    key = jax.random.PRNGKey(0)
    kx, kp, kx2, kp2 = jax.random.split(key, 4)

    # --- Small-D case (D < 128 exercises the lane-padding path). ------------
    B, L, D, K = 2, 8, 32, 3
    x = jax.random.normal(kx, (B, L, D), dtype=jnp.float32)
    w1, b1, w2, b2 = _make_params(kp, D, K)
    ref = _reference(x, w1, b1, w2, b2)

    out_f32 = jax.block_until_ready(
        simple_conv_block(x, w1, b1, w2, b2, kernel_size=K,
                          matmul_dtype=jnp.float32))
    np.testing.assert_allclose(np.asarray(out_f32), np.asarray(ref),
                               rtol=1e-5, atol=1e-5)

    out_bf16 = jax.block_until_ready(
        simple_conv_block(x, w1, b1, w2, b2, kernel_size=K))   # bf16 default
    np.testing.assert_allclose(np.asarray(out_bf16), np.asarray(ref),
                               rtol=5e-2, atol=5e-2)

    # --- D == 128 case (no channel padding, multi-sequence tile). -----------
    B2, L2, D2 = 4, 16, 128
    x2 = jax.random.normal(kx2, (B2, L2, D2), dtype=jnp.float32)
    w1b, b1b, w2b, b2b = _make_params(kp2, D2, K)
    ref2 = _reference(x2, w1b, b1b, w2b, b2b)
    out2 = jax.block_until_ready(
        simple_conv_block(x2, w1b, b1b, w2b, b2b, kernel_size=K,
                          matmul_dtype=jnp.float32))
    np.testing.assert_allclose(np.asarray(out2), np.asarray(ref2),
                               rtol=1e-5, atol=1e-5)

    print("KERNEL_OK")
</pallas_src>

<mosaic_0001>
module attributes {stable_mosaic.version = 11 : i64} {
  func.func @_conv_block_kernel(%arg0: i32, %arg1: memref<1x8x32xf32, #tpu.memory_space<vmem>>, %arg2: memref<384x128xf32, #tpu.memory_space<vmem>>, %arg3: memref<1x128xf32, #tpu.memory_space<vmem>>, %arg4: memref<384x128xf32, #tpu.memory_space<vmem>>, %arg5: memref<1x128xf32, #tpu.memory_space<vmem>>, %arg6: memref<1x8x32xf32, #tpu.memory_space<vmem>>, %arg7: memref<1x17x128xf32, #tpu.memory_space<vmem>>, %arg8: memref<1x17x128xf32, #tpu.memory_space<vmem>>) attributes {dimension_semantics = [#tpu.dimension_semantics<parallel>], iteration_bounds = array<i64: 2>, scalar_prefetch = 0 : i64, scratch_operands = 2 : i64, tpu.core_type = #tpu.core_type<tc>, window_params = [{transform_indices = @transform_0, window_bounds = array<i64: 1, 8, 32>}, {pipeline_mode = #tpu.pipeline_mode<synchronous>, transform_indices = @transform_1, window_bounds = array<i64: 384, 128>}, {pipeline_mode = #tpu.pipeline_mode<synchronous>, transform_indices = @transform_2, window_bounds = array<i64: 1, 128>}, {pipeline_mode = #tpu.pipeline_mode<synchronous>, transform_indices = @transform_3, window_bounds = array<i64: 384, 128>}, {pipeline_mode = #tpu.pipeline_mode<synchronous>, transform_indices = @transform_4, window_bounds = array<i64: 1, 128>}, {transform_indices = @transform_5, window_bounds = array<i64: 1, 8, 32>}]} {
    %cst = arith.constant 0.000000e+00 : f32
    %0 = vector.broadcast %cst : f32 to vector<1x1x128xf32>
    %c0 = arith.constant 0 : index
    %c7 = arith.constant 7 : index
    %c0_0 = arith.constant 0 : index
    %1 = vector.load %arg7[%c0, %c7, %c0_0] : memref<1x17x128xf32, #tpu.memory_space<vmem>>, vector<1x1x128xf32>
    tpu.vector_store %arg7[%c0, %c7, %c0_0], %0 {strides = array<i32>} : memref<1x17x128xf32, #tpu.memory_space<vmem>>, vector<1x1x128xf32>,
    %c0_1 = arith.constant 0 : index
    %c16 = arith.constant 16 : index
    %c0_2 = arith.constant 0 : index
    %2 = vector.load %arg7[%c0_1, %c16, %c0_2] : memref<1x17x128xf32, #tpu.memory_space<vmem>>, vector<1x1x128xf32>
    tpu.vector_store %arg7[%c0_1, %c16, %c0_2], %0 {strides = array<i32>} : memref<1x17x128xf32, #tpu.memory_space<vmem>>, vector<1x1x128xf32>,
    %c0_3 = arith.constant 0 : index
    %c7_4 = arith.constant 7 : index
    %c0_5 = arith.constant 0 : index
    %3 = vector.load %arg8[%c0_3, %c7_4, %c0_5] : memref<1x17x128xf32, #tpu.memory_space<vmem>>, vector<1x1x128xf32>
    tpu.vector_store %arg8[%c0_3, %c7_4, %c0_5], %0 {strides = array<i32>} : memref<1x17x128xf32, #tpu.memory_space<vmem>>, vector<1x1x128xf32>,
    %c0_6 = arith.constant 0 : index
    %c16_7 = arith.constant 16 : index
    %c0_8 = arith.constant 0 : index
    %4 = vector.load %arg8[%c0_6, %c16_7, %c0_8] : memref<1x17x128xf32, #tpu.memory_space<vmem>>, vector<1x1x128xf32>
    tpu.vector_store %arg8[%c0_6, %c16_7, %c0_8], %0 {strides = array<i32>} : memref<1x17x128xf32, #tpu.memory_space<vmem>>, vector<1x1x128xf32>,
    %c0_9 = arith.constant 0 : index
    %c0_10 = arith.constant 0 : index
    %c0_11 = arith.constant 0 : index
    %5 = vector.load %arg1[%c0_9, %c0_10, %c0_11] : memref<1x8x32xf32, #tpu.memory_space<vmem>>, vector<1x8x32xf32>
    %cst_12 = arith.constant 0.000000e+00 : f32
    %6 = vector.broadcast %cst_12 : f32 to vector<1x8x96xf32>
    %7 = tpu.concatenate %5, %6 in 2 : vector<1x8x32xf32>, vector<1x8x96xf32> -> vector<1x8x128xf32>
    %c0_13 = arith.constant 0 : index
    %c8 = arith.constant 8 : index
    %c0_14 = arith.constant 0 : index
    %8 = vector.load %arg7[%c0_13, %c8, %c0_14] : memref<1x17x128xf32, #tpu.memory_space<vmem>>, vector<1x8x128xf32>
    tpu.vector_store %arg7[%c0_13, %c8, %c0_14], %7 {strides = array<i32>} : memref<1x17x128xf32, #tpu.memory_space<vmem>>, vector<1x8x128xf32>,
    %c0_15 = arith.constant 0 : index
    %c7_16 = arith.constant 7 : index
    %c0_17 = arith.constant 0 : index
    %9 = vector.load %arg7[%c0_15, %c7_16, %c0_17] : memref<1x17x128xf32, #tpu.memory_space<vmem>>, vector<1x8x128xf32>
    %10 = vector.shape_cast %9 : vector<1x8x128xf32> to vector<8x128xf32>
    %c0_18 = arith.constant 0 : index
    %c8_19 = arith.constant 8 : index
    %c0_20 = arith.constant 0 : index
    %11 = vector.load %arg7[%c0_18, %c8_19, %c0_20] : memref<1x17x128xf32, #tpu.memory_space<vmem>>, vector<1x8x128xf32>
    %12 = vector.shape_cast %11 : vector<1x8x128xf32> to vector<8x128xf32>
    %c0_21 = arith.constant 0 : index
    %c9 = arith.constant 9 : index
    %c0_22 = arith.constant 0 : index
    %13 = vector.load %arg7[%c0_21, %c9, %c0_22] : memref<1x17x128xf32, #tpu.memory_space<vmem>>, vector<1x8x128xf32>
    %14 = vector.shape_cast %13 : vector<1x8x128xf32> to vector<8x128xf32>
    %15 = tpu.concatenate %10, %12, %14 in 1 : vector<8x128xf32>, vector<8x128xf32>, vector<8x128xf32> -> vector<8x384xf32>
    %c0_23 = arith.constant 0 : index
    %c0_24 = arith.constant 0 : index
    %16 = vector.load %arg2[%c0_23, %c0_24] : memref<384x128xf32, #tpu.memory_space<vmem>>, vector<384x128xf32>
    %cst_25 = arith.constant dense<0.000000e+00> : vector<8x128xf32>
    %17 = tpu.matmul %15, %16, %cst_25 {dimension_numbers = #tpu.dot_dimension_numbers<[1], [0], [0], [1], [0, 0, 1, 1], [], []>} : vector<8x384xf32>, vector<384x128xf32>, vector<8x128xf32> -> vector<8x128xf32>
    %c0_26 = arith.constant 0 : index
    %c0_27 = arith.constant 0 : index
    %18 = vector.load %arg3[%c0_26, %c0_27] : memref<1x128xf32, #tpu.memory_space<vmem>>, vector<1x128xf32>
    %19 = vector.broadcast %18 : vector<1x128xf32> to vector<8x128xf32>
    %20 = arith.addf %17, %19 : vector<8x128xf32>
    %cst_28 = arith.constant 0.000000e+00 : f32
    %21 = vector.broadcast %cst_28 : f32 to vector<8x128xf32>
    %22 = arith.maximumf %20, %21 : vector<8x128xf32>
    %23 = vector.shape_cast %22 : vector<8x128xf32> to vector<1x8x128xf32>
    %c0_29 = arith.constant 0 : index
    %c8_30 = arith.constant 8 : index
    %c0_31 = arith.constant 0 : index
    %24 = vector.load %arg8[%c0_29, %c8_30, %c0_31] : memref<1x17x128xf32, #tpu.memory_space<vmem>>, vector<1x8x128xf32>
    tpu.vector_store %arg8[%c0_29, %c8_30, %c0_31], %23 {strides = array<i32>} : memref<1x17x128xf32, #tpu.memory_space<vmem>>, vector<1x8x128xf32>,
    %c0_32 = arith.constant 0 : index
    %c7_33 = arith.constant 7 : index
    %c0_34 = arith.constant 0 : index
    %25 = vector.load %arg8[%c0_32, %c7_33, %c0_34] : memref<1x17x128xf32, #tpu.memory_space<vmem>>, vector<1x8x128xf32>
    %26 = vector.shape_cast %25 : vector<1x8x128xf32> to vector<8x128xf32>
    %c0_35 = arith.constant 0 : index
    %c8_36 = arith.constant 8 : index
    %c0_37 = arith.constant 0 : index
    %27 = vector.load %arg8[%c0_35, %c8_36, %c0_37] : memref<1x17x128xf32, #tpu.memory_space<vmem>>, vector<1x8x128xf32>
    %28 = vector.shape_cast %27 : vector<1x8x128xf32> to vector<8x128xf32>
    %c0_38 = arith.constant 0 : index
    %c9_39 = arith.constant 9 : index
    %c0_40 = arith.constant 0 : index
    %29 = vector.load %arg8[%c0_38, %c9_39, %c0_40] : memref<1x17x128xf32, #tpu.memory_space<vmem>>, vector<1x8x128xf32>
    %30 = vector.shape_cast %29 : vector<1x8x128xf32> to vector<8x128xf32>
    %31 = tpu.concatenate %26, %28, %30 in 1 : vector<8x128xf32>, vector<8x128xf32>, vector<8x128xf32> -> vector<8x384xf32>
    %c0_41 = arith.constant 0 : index
    %c0_42 = arith.constant 0 : index
    %32 = vector.load %arg4[%c0_41, %c0_42] : memref<384x128xf32, #tpu.memory_space<vmem>>, vector<384x128xf32>
    %cst_43 = arith.constant dense<0.000000e+00> : vector<8x128xf32>
    %33 = tpu.matmul %31, %32, %cst_43 {dimension_numbers = #tpu.dot_dimension_numbers<[1], [0], [0], [1], [0, 0, 1, 1], [], []>} : vector<8x384xf32>, vector<384x128xf32>, vector<8x128xf32> -> vector<8x128xf32>
    %c0_44 = arith.constant 0 : index
    %c0_45 = arith.constant 0 : index
    %34 = vector.load %arg5[%c0_44, %c0_45] : memref<1x128xf32, #tpu.memory_space<vmem>>, vector<1x128xf32>
    %35 = vector.broadcast %34 : vector<1x128xf32> to vector<8x128xf32>
    %36 = arith.addf %33, %35 : vector<8x128xf32>
    %cst_46 = arith.constant 0.000000e+00 : f32
    %37 = vector.broadcast %cst_46 : f32 to vector<8x128xf32>
    %38 = arith.maximumf %36, %37 : vector<8x128xf32>
    %39 = vector.extract_strided_slice %38 {offsets = [0, 0], sizes = [8, 32], strides = [1, 1]} : vector<8x128xf32> to vector<8x32xf32>
    %40 = vector.shape_cast %39 : vector<8x32xf32> to vector<1x8x32xf32>
    %c0_47 = arith.constant 0 : index
    %c0_48 = arith.constant 0 : index
    %c0_49 = arith.constant 0 : index
    %41 = vector.load %arg6[%c0_47, %c0_48, %c0_49] : memref<1x8x32xf32, #tpu.memory_space<vmem>>, vector<1x8x32xf32>
    tpu.vector_store %arg6[%c0_47, %c0_48, %c0_49], %40 {strides = array<i32>} : memref<1x8x32xf32, #tpu.memory_space<vmem>>, vector<1x8x32xf32>,
    return
  }
  func.func @transform_0(%arg0: i32) -> (i32, i32, i32) {
    %c0_i32 = arith.constant 0 : i32
    %c0_i32_0 = arith.constant 0 : i32
    %c0_i32_1 = arith.constant 0 : i32
    return %arg0, %c0_i32, %c0_i32_0 : i32, i32, i32
  }
  func.func @transform_1(%arg0: i32) -> (i32, i32) {
    %c0_i32 = arith.constant 0 : i32
    %c0_i32_0 = arith.constant 0 : i32
    %c0_i32_1 = arith.constant 0 : i32
    return %c0_i32, %c0_i32_0 : i32, i32
  }
  func.func @transform_2(%arg0: i32) -> (i32, i32) {
    %c0_i32 = arith.constant 0 : i32
    %c0_i32_0 = arith.constant 0 : i32
    %c0_i32_1 = arith.constant 0 : i32
    return %c0_i32, %c0_i32_0 : i32, i32
  }
  func.func @transform_3(%arg0: i32) -> (i32, i32) {
    %c0_i32 = arith.constant 0 : i32
    %c0_i32_0 = arith.constant 0 : i32
    %c0_i32_1 = arith.constant 0 : i32
    return %c0_i32, %c0_i32_0 : i32, i32
  }
  func.func @transform_4(%arg0: i32) -> (i32, i32) {
    %c0_i32 = arith.constant 0 : i32
    %c0_i32_0 = arith.constant 0 : i32
    %c0_i32_1 = arith.constant 0 : i32
    return %c0_i32, %c0_i32_0 : i32, i32
  }
  func.func @transform_5(%arg0: i32) -> (i32, i32, i32) {
    %c0_i32 = arith.constant 0 : i32
    %c0_i32_0 = arith.constant 0 : i32
    %c0_i32_1 = arith.constant 0 : i32
    return %arg0, %c0_i32, %c0_i32_0 : i32, i32, i32
  }
}

</mosaic_0001>

<llo_original>
// kernel: simple_conv_block.1
$region0: #{simple_conv_block.1}
  #allocation0 [shape = 'u32[]', space=smem, size = 0x4, offset = 0x4, fixed_abs, tag = 'smem constant byte address 0x4 - core index']
  #allocation1 [shape = 'u32[144,128]{1,0:T(1,128)}', space=vmem, size = 0x12000, scoped, tag = 'internal scratch']
  #allocation2 [shape = 'f32[1,17,128]{2,1,0:T(8,128)}', space=vmem, size = 0x3000, scoped, tag = 'scratch operand']
  #allocation3 [shape = 'f32[1,17,128]{2,1,0:T(8,128)}', space=vmem, size = 0x3000, scoped, tag = 'scratch operand']
  %s0 = inlined_call_operand.vmem [shape: f32[2,8,32], index: 0, kind: input, shape index: {}]
  %s1 = inlined_call_operand.vmem [shape: f32[384,128], index: 1, kind: input, shape index: {}]
  %s2 = inlined_call_operand.vmem [shape: f32[1,128], index: 2, kind: input, shape index: {}]
  %s3 = inlined_call_operand.vmem [shape: f32[384,128], index: 3, kind: input, shape index: {}]
  %s4 = inlined_call_operand.vmem [shape: f32[1,128], index: 4, kind: input, shape index: {}]
  %s5 = inlined_call_operand.hbm [shape: f32[2,8,32], index: 5, kind: output, shape index: {}]
  %s6 = sld [smem:[#allocation0]]
  $region53: #{simple_conv_block.1} parent=0
    _
  %s8 = ssub.s32 1, %s6
  %s9 = scalar_select 0, %s8, %s6
  $region1: #{simple_conv_block.1} parent=0
    #allocation4 [shape = 'u8[8192]{0}', space=vmem, size = 0x2000, scoped, tag = 'output window, operand 0']
    #allocation5 [shape = 's32[2]{0}', space=sflag, size = 0x8, scoped, tag = 'scoped memory for simple_conv_block.1']
    %10 = vsyncpa [#allocation5], 0
    %s11 = scalar_lea.sflag [#allocation5], 1
    %12 = vsyncpa %s11, 0
    loop: start=0, step=1, limit=4
    $region2: #{simple_conv_block.1} parent=1 // loop_pre_header
      _
    $region3: #{simple_conv_block.1} parent=1 // loop_header
      %s14 = sphi 0, %s18
      %p15 = scmp.ge.s32.totalorder %s14, 4
      %s24 = sphi 0, %s26
      %s27 = sphi 0, %s24
      %s28 = sphi 0, %s27
      %s44 = sphi 0, %s28
      %s48 = sphi 0, %s48
      %s50 = sphi 0, %s48
      %s51 = sphi 0, %s50
      %s65 = sphi 0, %s51
      %s69 = sphi 0, %s69
      %s71 = sphi 0, %s69
      %s72 = sphi 0, %s71
      %s86 = sphi 0, %s72
      %s90 = sphi 0, %s90
      %s92 = sphi 0, %s90
      %s93 = sphi 0, %s92
      %s107 = sphi 0, %s93
      %s111 = sphi 0, %s111
      %s113 = sphi 0, %s111
      %s114 = sphi 0, %s113
      %s128 = sphi 0, %s114
      %s134 = sphi 0, %s136
      %s137 = sphi 0, %s134
      %s138 = sphi 0, %s137
      %s154 = sphi 0, %s138
    $region4: #{simple_conv_block.1} parent=1 // loop_header_branch
      %17 = sbr.rel (%p15) target = $region8
    $region5: #{simple_conv_block.1} parent=1 // loop_body
      %s19 = ssub.s32 %s14, 1
      %s20 = ssub.s32 %s14, 2
      %s21 = sadd.s32 %s14, 1
      %s22 = ssub.s32 %s14, %s21
      %p23 = scmp.eq.s32.totalorder %s22, 0
      %s25 = sadd.s32 %s24, 1
      %s26 = scalar_select %p23, %s24, %s25
      %p29 = pneg %p23
      %p30 = scmp.eq.s32.totalorder %s14, 1
      %p31 = por %p29, %p30
      %p32 = scmp.ne.s32.totalorder %s24, %s27
      %p33 = scmp.eq.s32.totalorder %s14, 0
      %p34 = por %p32, %p33
      %p35 = scmp.ne.s32.totalorder %s24, %s27
      %p36 = scmp.eq.s32.totalorder %s19, 1
      %p37 = por %p35, %p36
      %p38 = scmp.ne.s32.totalorder %s27, %s28
      %p39 = scmp.eq.s32.totalorder %s19, 0
      %p40 = por %p38, %p39
      %p41 = scmp.ne.s32.totalorder %s27, %s28
      %p42 = scmp.eq.s32.totalorder %s20, 1
      %p43 = por %p41, %p42
      %p45 = scmp.ne.s32.totalorder %s28, %s44
      %p46 = scmp.eq.s32.totalorder %s20, 0
      %p47 = por %p45, %p46
      %s49 = sadd.s32 %s48, 1
      %p52 = scmp.eq.s32.totalorder %s14, 1
      %p53 = scmp.ne.s32.totalorder %s48, %s50
      %p54 = scmp.eq.s32.totalorder %s14, 0
      %p55 = por %p53, %p54
      %p56 = scmp.ne.s32.totalorder %s48, %s50
      %p57 = scmp.eq.s32.totalorder %s19, 1
      %p58 = por %p56, %p57
      %p59 = scmp.ne.s32.totalorder %s50, %s51
      %p60 = scmp.eq.s32.totalorder %s19, 0
      %p61 = por %p59, %p60
      %p62 = scmp.ne.s32.totalorder %s50, %s51
      %p63 = scmp.eq.s32.totalorder %s20, 1
      %p64 = por %p62, %p63
      %p66 = scmp.ne.s32.totalorder %s51, %s65
      %p67 = scmp.eq.s32.totalorder %s20, 0
      %p68 = por %p66, %p67
      %s70 = sadd.s32 %s69, 1
      %p73 = scmp.eq.s32.totalorder %s14, 1
      %p74 = scmp.ne.s32.totalorder %s69, %s71
      %p75 = scmp.eq.s32.totalorder %s14, 0
      %p76 = por %p74, %p75
      %p77 = scmp.ne.s32.totalorder %s69, %s71
      %p78 = scmp.eq.s32.totalorder %s19, 1
      %p79 = por %p77, %p78
      %p80 = scmp.ne.s32.totalorder %s71, %s72
      %p81 = scmp.eq.s32.totalorder %s19, 0
      %p82 = por %p80, %p81
      %p83 = scmp.ne.s32.totalorder %s71, %s72
      %p84 = scmp.eq.s32.totalorder %s20, 1
      %p85 = por %p83, %p84
      %p87 = scmp.ne.s32.totalorder %s72, %s86
      %p88 = scmp.eq.s32.totalorder %s20, 0
      %p89 = por %p87, %p88
      %s91 = sadd.s32 %s90, 1
      %p94 = scmp.eq.s32.totalorder %s14, 1
      %p95 = scmp.ne.s32.totalorder %s90, %s92
      %p96 = scmp.eq.s32.totalorder %s14, 0
      %p97 = por %p95, %p96
      %p98 = scmp.ne.s32.totalorder %s90, %s92
      %p99 = scmp.eq.s32.totalorder %s19, 1
      %p100 = por %p98, %p99
      %p101 = scmp.ne.s32.totalorder %s92, %s93
      %p102 = scmp.eq.s32.totalorder %s19, 0
      %p103 = por %p101, %p102
      %p104 = scmp.ne.s32.totalorder %s92, %s93
      %p105 = scmp.eq.s32.totalorder %s20, 1
      %p106 = por %p104, %p105
      %p108 = scmp.ne.s32.totalorder %s93, %s107
      %p109 = scmp.eq.s32.totalorder %s20, 0
      %p110 = por %p108, %p109
      %s112 = sadd.s32 %s111, 1
      %p115 = scmp.eq.s32.totalorder %s14, 1
      %p116 = scmp.ne.s32.totalorder %s111, %s113
      %p117 = scmp.eq.s32.totalorder %s14, 0
      %p118 = por %p116, %p117
      %p119 = scmp.ne.s32.totalorder %s111, %s113
      %p120 = scmp.eq.s32.totalorder %s19, 1
      %p121 = por %p119, %p120
      %p122 = scmp.ne.s32.totalorder %s113, %s114
      %p123 = scmp.eq.s32.totalorder %s19, 0
      %p124 = por %p122, %p123
      %p125 = scmp.ne.s32.totalorder %s113, %s114
      %p126 = scmp.eq.s32.totalorder %s20, 1
      %p127 = por %p125, %p126
      %p129 = scmp.ne.s32.totalorder %s114, %s128
      %p130 = scmp.eq.s32.totalorder %s20, 0
      %p131 = por %p129, %p130
      %s132 = ssub.s32 %s14, %s21
      %p133 = scmp.eq.s32.totalorder %s132, 0
      %s135 = sadd.s32 %s134, 1
      %s136 = scalar_select %p133, %s134, %s135
      %p139 = pneg %p133
      %p140 = scmp.eq.s32.totalorder %s14, 1
      %p141 = por %p139, %p140
      %p142 = scmp.ne.s32.totalorder %s134, %s137
      %p143 = scmp.eq.s32.totalorder %s14, 0
      %p144 = por %p142, %p143
      %p145 = scmp.ne.s32.totalorder %s134, %s137
      %p146 = scmp.eq.s32.totalorder %s19, 1
      %p147 = por %p145, %p146
      %p148 = scmp.ne.s32.totalorder %s137, %s138
      %p149 = scmp.eq.s32.totalorder %s19, 0
      %p150 = por %p148, %p149
      %p151 = scmp.ne.s32.totalorder %s137, %s138
      %p152 = scmp.eq.s32.totalorder %s20, 1
      %p153 = por %p151, %p152
      %p155 = scmp.ne.s32.totalorder %s138, %s154
      %p156 = scmp.eq.s32.totalorder %s20, 0
      %p157 = por %p155, %p156
      %p158 = scmp.le.s32.totalorder 1, %s14
      %p159 = scmp.lt.s32.totalorder %s14, 3
      %p160 = pnand %p158, %p159
      %p161 = pneg %p160
      // Predicated region
      $region9: #{simple_conv_block.1} parent=5 // pred_check
        _
      $region10: #{simple_conv_block.1} parent=5 // pred_check_branch
        %163 = sbr.rel (%p160) target = $region12
      $region11: #{simple_conv_block.1} parent=5 // pred_region
        %s164 = ssub.s32 %s14, 1
        // Predicated region
        $region13: #{simple_conv_block.1} parent=11 // pred_check
          %p165 = pneg %p61
        $region14: #{simple_conv_block.1} parent=11 // pred_check_branch
          %167 = sbr.rel (%p165) target = $region16
        $region15: #{simple_conv_block.1} parent=11 // pred_region
          _
        $region16: #{simple_conv_block.1} parent=11 // pred_fallthru
          _
        // Predicated region
        $region17: #{simple_conv_block.1} parent=11 // pred_check
          %p168 = pneg %p82
        $region18: #{simple_conv_block.1} parent=11 // pred_check_branch
          %170 = sbr.rel (%p168) target = $region20
        $region19: #{simple_conv_block.1} parent=11 // pred_region
          _
        $region20: #{simple_conv_block.1} parent=11 // pred_fallthru
          _
        // Predicated region
        $region21: #{simple_conv_block.1} parent=11 // pred_check
          %p171 = pneg %p103
        $region22: #{simple_conv_block.1} parent=11 // pred_check_branch
          %173 = sbr.rel (%p171) target = $region24
        $region23: #{simple_conv_block.1} parent=11 // pred_region
          _
        $region24: #{simple_conv_block.1} parent=11 // pred_fallthru
          _
        // Predicated region
        $region25: #{simple_conv_block.1} parent=11 // pred_check
          %p174 = pneg %p124
        $region26: #{simple_conv_block.1} parent=11 // pred_check_branch
          %176 = sbr.rel (%p174) target = $region28
        $region27: #{simple_conv_block.1} parent=11 // pred_region
          _
        $region28: #{simple_conv_block.1} parent=11 // pred_fallthru
          _
      $region12: #{simple_conv_block.1} parent=5 // pred_fallthru
        _
      %p177 = scmp.lt.s32.totalorder %s14, 2
      // Predicated region
      $region29: #{simple_conv_block.1} parent=5 // pred_check
        %p178 = pneg %p177
      $region30: #{simple_conv_block.1} parent=5 // pred_check_branch
        %180 = sbr.rel (%p178) target = $region32
      $region31: #{simple_conv_block.1} parent=5 // pred_region
        // Predicated region
        $region33: #{simple_conv_block.1} parent=31 // pred_check
          %p181 = pneg %p34
        $region34: #{simple_conv_block.1} parent=31 // pred_check_branch
          %183 = sbr.rel (%p181) target = $region36
        $region35: #{simple_conv_block.1} parent=31 // pred_region
          %p184 = scmp.lt.s32.totalorder %s14, 1
          %s185 = scalar_select %p184, %s14, 1
          %s186 = smul.addr %s185, 8
          %s187 = scalar_lea.vmem %s0, %s186
        $region36: #{simple_conv_block.1} parent=31 // pred_fallthru
          _
      $region32: #{simple_conv_block.1} parent=5 // pred_fallthru
        _
      %p188 = scmp.le.s32.totalorder 1, %s14
      %p189 = scmp.lt.s32.totalorder %s14, 3
      %p190 = pnand %p188, %p189
      %p191 = pneg %p190
      // Predicated region
      $region37: #{simple_conv_block.1} parent=5 // pred_check
        _
      $region38: #{simple_conv_block.1} parent=5 // pred_check_branch
        %193 = sbr.rel (%p190) target = $region40
      $region39: #{simple_conv_block.1} parent=5 // pred_region
        %s194 = ssub.s32 %s14, 1
        %p195 = scmp.lt.s32.totalorder %s19, 1
        %s196 = scalar_select %p195, %s19, 1
        %s197 = smul.addr %s196, 8
        %s198 = scalar_lea.vmem %s0, %s197
        %p199 = pneg %p40
        %p200 = pneg %p37
        %p201 = pneg %p61
        %p202 = pneg %p58
        %p203 = pneg %p82
        %p204 = pneg %p79
        %p205 = pneg %p103
        %p206 = pneg %p100
        %p207 = pneg %p124
        %p208 = pneg %p121
        %p209 = pneg %p150
        %p210 = pneg %p147
        %s211 = sand.u32 %s137, 1
        %s212 = scalar_lea.sflag [#allocation5], %s211
        %s213 = sand.u32 %s137, 1
        %s214 = smul.addr %s213, 8
        %s215 = scalar_lea.vmem [#allocation4], %s214
        %p216 = scmp.lt.s32.totalorder %s19, 1
        %s217 = scalar_select %p216, %s19, 1
        %s218 = smul.addr %s217, 8
        %s219 = scalar_lea.vmem %s0, %s218
        %220 = vst [vmem:[#allocation2 + $0x7] sm:$0x1] 0.0
        %221 = vst [vmem:[#allocation2 + $0x10] sm:$0x1] 0.0
        %222 = vst [vmem:[#allocation3 + $0x7] sm:$0x1] 0.0
        %223 = vst [vmem:[#allocation3 + $0x10] sm:$0x1] 0.0
        %v224 = vld [vmem:[%s219] sm:$0xff]
        %vm225 = vcmask 261120
        %v226 = vsel %vm225, %v224, 0.0
        %227 = vst [vmem:[#allocation2 + $0x8] sm:$0xff] %v226
        %v228 = vld [vmem:[#allocation2 + $0x7] sm:$0xff]
        %v229 = vld [vmem:[#allocation2 + $0x8] sm:$0xff]
        %v230 = vld [vmem:[#allocation2 + $0x9] sm:$0xff]
        %v231 = vld [vmem:[%s1] sm:$0xff]
        %v232 = vld [vmem:[%s1 + $0x8] sm:$0xff]
        %v233 = vld [vmem:[%s1 + $0x10] sm:$0xff]
        %v234 = vld [vmem:[%s1 + $0x18] sm:$0xff]
        %v235 = vld [vmem:[%s1 + $0x20] sm:$0xff]
        %v236 = vld [vmem:[%s1 + $0x28] sm:$0xff]
        %v237 = vld [vmem:[%s1 + $0x30] sm:$0xff]
        %v238 = vld [vmem:[%s1 + $0x38] sm:$0xff]
        %v239 = vld [vmem:[%s1 + $0x40] sm:$0xff]
        %v240 = vld [vmem:[%s1 + $0x48] sm:$0xff]
        %v241 = vld [vmem:[%s1 + $0x50] sm:$0xff]
        %v242 = vld [vmem:[%s1 + $0x58] sm:$0xff]
        %v243 = vld [vmem:[%s1 + $0x60] sm:$0xff]
        %v244 = vld [vmem:[%s1 + $0x68] sm:$0xff]
        %v245 = vld [vmem:[%s1 + $0x70] sm:$0xff]
        %v246 = vld [vmem:[%s1 + $0x78] sm:$0xff]
        %v247 = vld [vmem:[%s1 + $0x80] sm:$0xff]
        %v248 = vld [vmem:[%s1 + $0x88] sm:$0xff]
        %v249 = vld [vmem:[%s1 + $0x90] sm:$0xff]
        %v250 = vld [vmem:[%s1 + $0x98] sm:$0xff]
        %v251 = vld [vmem:[%s1 + $0xa0] sm:$0xff]
        %v252 = vld [vmem:[%s1 + $0xa8] sm:$0xff]
        %v253 = vld [vmem:[%s1 + $0xb0] sm:$0xff]
        %v254 = vld [vmem:[%s1 + $0xb8] sm:$0xff]
        %v255 = vld [vmem:[%s1 + $0xc0] sm:$0xff]
        %v256 = vld [vmem:[%s1 + $0xc8] sm:$0xff]
        %v257 = vld [vmem:[%s1 + $0xd0] sm:$0xff]
        %v258 = vld [vmem:[%s1 + $0xd8] sm:$0xff]
        %v259 = vld [vmem:[%s1 + $0xe0] sm:$0xff]
        %v260 = vld [vmem:[%s1 + $0xe8] sm:$0xff]
        %v261 = vld [vmem:[%s1 + $0xf0] sm:$0xff]
        %v262 = vld [vmem:[%s1 + $0xf8] sm:$0xff]
        %v263 = vld [vmem:[%s1 + $0x100] sm:$0xff]
        %v264 = vld [vmem:[%s1 + $0x108] sm:$0xff]
        %v265 = vld [vmem:[%s1 + $0x110] sm:$0xff]
        %v266 = vld [vmem:[%s1 + $0x118] sm:$0xff]
        %v267 = vld [vmem:[%s1 + $0x120] sm:$0xff]
        %v268 = vld [vmem:[%s1 + $0x128] sm:$0xff]
        %v269 = vld [vmem:[%s1 + $0x130] sm:$0xff]
        %v270 = vld [vmem:[%s1 + $0x138] sm:$0xff]
        %v271 = vld [vmem:[%s1 + $0x140] sm:$0xff]
        %v272 = vld [vmem:[%s1 + $0x148] sm:$0xff]
        %v273 = vld [vmem:[%s1 + $0x150] sm:$0xff]
        %v274 = vld [vmem:[%s1 + $0x158] sm:$0xff]
        %v275 = vld [vmem:[%s1 + $0x160] sm:$0xff]
        %v276 = vld [vmem:[%s1 + $0x168] sm:$0xff]
        %v277 = vld [vmem:[%s1 + $0x170] sm:$0xff]
        %v278 = vld [vmem:[%s1 + $0x178] sm:$0xff]
        %v279 = vld [vmem:[%s2] sm:$0x1]
        %v281 = vlaneseq
        %v282 = vshrl.u32 %v281, 7
        %v283 = vsub.s32 0, %v282
        %v284 = vrot.slane %v279, %v283
        %286 = vmatprep.subr.mxu0 0.0
        %287 = vmatpush1.msra.mxu0 %v231
        %288 = vmatprep.subr.mxu0 0.0
        %289 = vmatpush1.msra.mxu0 %v232
        %290 = vmatprep.subr.mxu0 0.0
        %291 = vmatpush1.msra.mxu0 %v233
        %292 = vmatprep.subr.mxu0 0.0
        %293 = vmatpush1.msra.mxu0 %v234
        %294 = vmatprep.subr.mxu0 0.0
        %295 = vmatpush1.msra.mxu0 %v235
        %296 = vmatprep.subr.mxu0 0.0
        %297 = vmatpush1.msra.mxu0 %v236
        %298 = vmatprep.subr.mxu0 0.0
        %299 = vmatpush1.msra.mxu0 %v237
        %300 = vmatprep.subr.mxu0 0.0
        %301 = vmatpush1.msra.mxu0 %v238
        %302 = vmatprep.subr.mxu0 0.0
        %303 = vmatpush1.msra.mxu0 %v239
        %304 = vmatprep.subr.mxu0 0.0
        %305 = vmatpush1.msra.mxu0 %v240
        %306 = vmatprep.subr.mxu0 0.0
        %307 = vmatpush1.msra.mxu0 %v241
        %308 = vmatprep.subr.mxu0 0.0
        %309 = vmatpush1.msra.mxu0 %v242
        %310 = vmatprep.subr.mxu0 0.0
        %311 = vmatpush1.msra.mxu0 %v243
        %312 = vmatprep.subr.mxu0 0.0
        %313 = vmatpush1.msra.mxu0 %v244
        %314 = vmatprep.subr.mxu0 0.0
        %315 = vmatpush1.msra.mxu0 %v245
        %316 = vmatprep.subr.mxu0 0.0
        %317 = vmatpush1.msra.mxu0 %v246
        %318 = vmatprep.subr.mxu0 0.0
        %319 = vmatpush1.msra.mxu0 %v247
        %320 = vmatprep.subr.mxu0 0.0
        %321 = vmatpush1.msra.mxu0 %v248
        %322 = vmatprep.subr.mxu0 0.0
        %323 = vmatpush1.msra.mxu0 %v249
        %324 = vmatprep.subr.mxu0 0.0
        %325 = vmatpush1.msra.mxu0 %v250
        %326 = vmatprep.subr.mxu0 0.0
        %327 = vmatpush1.msra.mxu0 %v251
        %328 = vmatprep.subr.mxu0 0.0
        %329 = vmatpush1.msra.mxu0 %v252
        %330 = vmatprep.subr.mxu0 0.0
        %331 = vmatpush1.msra.mxu0 %v253
        %332 = vmatprep.subr.mxu0 0.0
        %333 = vmatpush1.msra.mxu0 %v254
        %334 = vmatprep.subr.mxu0 0.0
        %335 = vmatpush1.msra.mxu0 %v255
        %336 = vmatprep.subr.mxu0 0.0
        %337 = vmatpush1.msra.mxu0 %v256
        %338 = vmatprep.subr.mxu0 0.0
        %339 = vmatpush1.msra.mxu0 %v257
        %340 = vmatprep.subr.mxu0 0.0
        %341 = vmatpush1.msra.mxu0 %v258
        %342 = vmatprep.subr.mxu0 0.0
        %343 = vmatpush1.msra.mxu0 %v259
        %344 = vmatprep.subr.mxu0 0.0
        %345 = vmatpush1.msra.mxu0 %v260
        %346 = vmatprep.subr.mxu0 0.0
        %347 = vmatpush1.msra.mxu0 %v261
        %348 = vmatprep.subr.mxu0 0.0
        %349 = vmatpush1.msra.mxu0 %v262
        %350 = vmatprep.mubr.f32.mxu0 %v229
        %351 = vmatmul.mubr.f32.gmra.mrb[0].mxu0 %v228
        %v352 = vpop.f32.mrb[0].mxu0
        %v353 = vadd.f32 %v284, %v352
        %v354 = vpop.f32.mrb[0].mxu0
        %355 = vdwg.mxu0
        %356 = vmatprep.subr.mxu0 0.0
        %357 = vmatpush1.msra.mxu0 %v263
        %358 = vmatprep.subr.mxu0 0.0
        %359 = vmatpush1.msra.mxu0 %v264
        %360 = vmatprep.subr.mxu0 0.0
        %361 = vmatpush1.msra.mxu0 %v265
        %362 = vmatprep.subr.mxu0 0.0
        %363 = vmatpush1.msra.mxu0 %v266
        %364 = vmatprep.subr.mxu0 0.0
        %365 = vmatpush1.msra.mxu0 %v267
        %366 = vmatprep.subr.mxu0 0.0
        %367 = vmatpush1.msra.mxu0 %v268
        %368 = vmatprep.subr.mxu0 0.0
        %369 = vmatpush1.msra.mxu0 %v269
        %370 = vmatprep.subr.mxu0 0.0
        %371 = vmatpush1.msra.mxu0 %v270
        %372 = vmatprep.subr.mxu0 0.0
        %373 = vmatpush1.msra.mxu0 %v271
        %374 = vmatprep.subr.mxu0 0.0
        %375 = vmatpush1.msra.mxu0 %v272
        %376 = vmatprep.subr.mxu0 0.0
        %377 = vmatpush1.msra.mxu0 %v273
        %378 = vmatprep.subr.mxu0 0.0
        %379 = vmatpush1.msra.mxu0 %v274
        %380 = vmatprep.subr.mxu0 0.0
        %381 = vmatpush1.msra.mxu0 %v275
        %382 = vmatprep.subr.mxu0 0.0
        %383 = vmatpush1.msra.mxu0 %v276
        %384 = vmatprep.subr.mxu0 0.0
        %385 = vmatpush1.msra.mxu0 %v277
        %386 = vmatprep.subr.mxu0 0.0
        %387 = vmatpush1.msra.mxu0 %v278
        %388 = vmatprep.subr.mxu0 0.0
        %389 = vmatpush1.msra.mxu0 0.0
        %390 = vmatprep.subr.mxu0 0.0
        %391 = vmatpush1.msra.mxu0 0.0
        %392 = vmatprep.subr.mxu0 0.0
        %393 = vmatpush1.msra.mxu0 0.0
        %394 = vmatprep.subr.mxu0 0.0
        %395 = vmatpush1.msra.mxu0 0.0
        %396 = vmatprep.subr.mxu0 0.0
        %397 = vmatpush1.msra.mxu0 0.0
        %398 = vmatprep.subr.mxu0 0.0
        %399 = vmatpush1.msra.mxu0 0.0
        %400 = vmatprep.subr.mxu0 0.0
        %401 = vmatpush1.msra.mxu0 0.0
        %402 = vmatprep.subr.mxu0 0.0
        %403 = vmatpush1.msra.mxu0 0.0
        %404 = vmatprep.subr.mxu0 0.0
        %405 = vmatpush1.msra.mxu0 0.0
        %406 = vmatprep.subr.mxu0 0.0
        %407 = vmatpush1.msra.mxu0 0.0
        %408 = vmatprep.subr.mxu0 0.0
        %409 = vmatpush1.msra.mxu0 0.0
        %410 = vmatprep.subr.mxu0 0.0
        %411 = vmatpush1.msra.mxu0 0.0
        %412 = vmatprep.subr.mxu0 0.0
        %413 = vmatpush1.msra.mxu0 0.0
        %414 = vmatprep.subr.mxu0 0.0
        %415 = vmatpush1.msra.mxu0 0.0
        %416 = vmatprep.subr.mxu0 0.0
        %417 = vmatpush1.msra.mxu0 0.0
        %418 = vmatprep.subr.mxu0 0.0
        %419 = vmatpush1.msra.mxu0 0.0
        %420 = vmatprep.mubr.f32.mxu0 0.0
        %421 = vmatmul.mubr.f32.gmra.mrb[0].mxu0 %v230
        %v422 = vpop.f32.mrb[0].mxu0
        %v423 = vadd.f32 %v353, %v422
        %v424 = vpop.f32.mrb[0].mxu0
        %425 = vdwg.mxu0
        %v426 = vmax.f32 %v423, 0.0
        %427 = vst [vmem:[#allocation3 + $0x8] sm:$0xff] %v426
        %v428 = vld [vmem:[#allocation3 + $0x7] sm:$0xff]
        %v429 = vld [vmem:[#allocation3 + $0x8] sm:$0xff]
        %v430 = vld [vmem:[#allocation3 + $0x9] sm:$0xff]
        %v431 = vld [vmem:[%s3] sm:$0xff]
        %v432 = vld [vmem:[%s3 + $0x8] sm:$0xff]
        %v433 = vld [vmem:[%s3 + $0x10] sm:$0xff]
        %v434 = vld [vmem:[%s3 + $0x18] sm:$0xff]
        %v435 = vld [vmem:[%s3 + $0x20] sm:$0xff]
        %v436 = vld [vmem:[%s3 + $0x28] sm:$0xff]
        %v437 = vld [vmem:[%s3 + $0x30] sm:$0xff]
        %v438 = vld [vmem:[%s3 + $0x38] sm:$0xff]
        %v439 = vld [vmem:[%s3 + $0x40] sm:$0xff]
        %v440 = vld [vmem:[%s3 + $0x48] sm:$0xff]
        %v441 = vld [vmem:[%s3 + $0x50] sm:$0xff]
        %v442 = vld [vmem:[%s3 + $0x58] sm:$0xff]
        %v443 = vld [vmem:[%s3 + $0x60] sm:$0xff]
        %v444 = vld [vmem:[%s3 + $0x68] sm:$0xff]
        %v445 = vld [vmem:[%s3 + $0x70] sm:$0xff]
        %v446 = vld [vmem:[%s3 + $0x78] sm:$0xff]
        %v447 = vld [vmem:[%s3 + $0x80] sm:$0xff]
        %v448 = vld [vmem:[%s3 + $0x88] sm:$0xff]
        %v449 = vld [vmem:[%s3 + $0x90] sm:$0xff]
        %v450 = vld [vmem:[%s3 + $0x98] sm:$0xff]
        %v451 = vld [vmem:[%s3 + $0xa0] sm:$0xff]
        %v452 = vld [vmem:[%s3 + $0xa8] sm:$0xff]
        %v453 = vld [vmem:[%s3 + $0xb0] sm:$0xff]
        %v454 = vld [vmem:[%s3 + $0xb8] sm:$0xff]
        %v455 = vld [vmem:[%s3 + $0xc0] sm:$0xff]
        %v456 = vld [vmem:[%s3 + $0xc8] sm:$0xff]
        %v457 = vld [vmem:[%s3 + $0xd0] sm:$0xff]
        %v458 = vld [vmem:[%s3 + $0xd8] sm:$0xff]
        %v459 = vld [vmem:[%s3 + $0xe0] sm:$0xff]
        %v460 = vld [vmem:[%s3 + $0xe8] sm:$0xff]
        %v461 = vld [vmem:[%s3 + $0xf0] sm:$0xff]
        %v462 = vld [vmem:[%s3 + $0xf8] sm:$0xff]
        %v463 = vld [vmem:[%s3 + $0x100] sm:$0xff]
        %v464 = vld [vmem:[%s3 + $0x108] sm:$0xff]
        %v465 = vld [vmem:[%s3 + $0x110] sm:$0xff]
        %v466 = vld [vmem:[%s3 + $0x118] sm:$0xff]
        %v467 = vld [vmem:[%s3 + $0x120] sm:$0xff]
        %v468 = vld [vmem:[%s3 + $0x128] sm:$0xff]
        %v469 = vld [vmem:[%s3 + $0x130] sm:$0xff]
        %v470 = vld [vmem:[%s3 + $0x138] sm:$0xff]
        %v471 = vld [vmem:[%s3 + $0x140] sm:$0xff]
        %v472 = vld [vmem:[%s3 + $0x148] sm:$0xff]
        %v473 = vld [vmem:[%s3 + $0x150] sm:$0xff]
        %v474 = vld [vmem:[%s3 + $0x158] sm:$0xff]
        %v475 = vld [vmem:[%s3 + $0x160] sm:$0xff]
        %v476 = vld [vmem:[%s3 + $0x168] sm:$0xff]
        %v477 = vld [vmem:[%s3 + $0x170] sm:$0xff]
        %v478 = vld [vmem:[%s3 + $0x178] sm:$0xff]
        %v479 = vld [vmem:[%s4] sm:$0x1]
        %v481 = vlaneseq
        %v482 = vshrl.u32 %v481, 7
        %v483 = vsub.s32 0, %v482
        %v484 = vrot.slane %v479, %v483
        %486 = vmatprep.subr.mxu0 0.0
        %487 = vmatpush1.msra.mxu0 %v431
        %488 = vmatprep.subr.mxu0 0.0
        %489 = vmatpush1.msra.mxu0 %v432
        %490 = vmatprep.subr.mxu0 0.0
        %491 = vmatpush1.msra.mxu0 %v433
        %492 = vmatprep.subr.mxu0 0.0
        %493 = vmatpush1.msra.mxu0 %v434
        %494 = vmatprep.subr.mxu0 0.0
        %495 = vmatpush1.msra.mxu0 %v435
        %496 = vmatprep.subr.mxu0 0.0
        %497 = vmatpush1.msra.mxu0 %v436
        %498 = vmatprep.subr.mxu0 0.0
        %499 = vmatpush1.msra.mxu0 %v437
        %500 = vmatprep.subr.mxu0 0.0
        %501 = vmatpush1.msra.mxu0 %v438
        %502 = vmatprep.subr.mxu0 0.0
        %503 = vmatpush1.msra.mxu0 %v439
        %504 = vmatprep.subr.mxu0 0.0
        %505 = vmatpush1.msra.mxu0 %v440
        %506 = vmatprep.subr.mxu0 0.0
        %507 = vmatpush1.msra.mxu0 %v441
        %508 = vmatprep.subr.mxu0 0.0
        %509 = vmatpush1.msra.mxu0 %v442
        %510 = vmatprep.subr.mxu0 0.0
        %511 = vmatpush1.msra.mxu0 %v443
        %512 = vmatprep.subr.mxu0 0.0
        %513 = vmatpush1.msra.mxu0 %v444
        %514 = vmatprep.subr.mxu0 0.0
        %515 = vmatpush1.msra.mxu0 %v445
        %516 = vmatprep.subr.mxu0 0.0
        %517 = vmatpush1.msra.mxu0 %v446
        %518 = vmatprep.subr.mxu0 0.0
        %519 = vmatpush1.msra.mxu0 %v447
        %520 = vmatprep.subr.mxu0 0.0
        %521 = vmatpush1.msra.mxu0 %v448
        %522 = vmatprep.subr.mxu0 0.0
        %523 = vmatpush1.msra.mxu0 %v449
        %524 = vmatprep.subr.mxu0 0.0
        %525 = vmatpush1.msra.mxu0 %v450
        %526 = vmatprep.subr.mxu0 0.0
        %527 = vmatpush1.msra.mxu0 %v451
        %528 = vmatprep.subr.mxu0 0.0
        %529 = vmatpush1.msra.mxu0 %v452
        %530 = vmatprep.subr.mxu0 0.0
        %531 = vmatpush1.msra.mxu0 %v453
        %532 = vmatprep.subr.mxu0 0.0
        %533 = vmatpush1.msra.mxu0 %v454
        %534 = vmatprep.subr.mxu0 0.0
        %535 = vmatpush1.msra.mxu0 %v455
        %536 = vmatprep.subr.mxu0 0.0
        %537 = vmatpush1.msra.mxu0 %v456
        %538 = vmatprep.subr.mxu0 0.0
        %539 = vmatpush1.msra.mxu0 %v457
        %540 = vmatprep.subr.mxu0 0.0
        %541 = vmatpush1.msra.mxu0 %v458
        %542 = vmatprep.subr.mxu0 0.0
        %543 = vmatpush1.msra.mxu0 %v459
        %544 = vmatprep.subr.mxu0 0.0
        %545 = vmatpush1.msra.mxu0 %v460
        %546 = vmatprep.subr.mxu0 0.0
        %547 = vmatpush1.msra.mxu0 %v461
        %548 = vmatprep.subr.mxu0 0.0
        %549 = vmatpush1.msra.mxu0 %v462
        %550 = vmatprep.mubr.f32.mxu0 %v429
        %551 = vmatmul.mubr.f32.gmra.mrb[0].mxu0 %v428
        %v552 = vpop.f32.mrb[0].mxu0
        %v553 = vadd.f32 %v484, %v552
        %v554 = vpop.f32.mrb[0].mxu0
        %555 = vdwg.mxu0
        %556 = vmatprep.subr.mxu0 0.0
        %557 = vmatpush1.msra.mxu0 %v463
        %558 = vmatprep.subr.mxu0 0.0
        %559 = vmatpush1.msra.mxu0 %v464
        %560 = vmatprep.subr.mxu0 0.0
        %561 = vmatpush1.msra.mxu0 %v465
        %562 = vmatprep.subr.mxu0 0.0
        %563 = vmatpush1.msra.mxu0 %v466
        %564 = vmatprep.subr.mxu0 0.0
        %565 = vmatpush1.msra.mxu0 %v467
        %566 = vmatprep.subr.mxu0 0.0
        %567 = vmatpush1.msra.mxu0 %v468
        %568 = vmatprep.subr.mxu0 0.0
        %569 = vmatpush1.msra.mxu0 %v469
        %570 = vmatprep.subr.mxu0 0.0
        %571 = vmatpush1.msra.mxu0 %v470
        %572 = vmatprep.subr.mxu0 0.0
        %573 = vmatpush1.msra.mxu0 %v471
        %574 = vmatprep.subr.mxu0 0.0
        %575 = vmatpush1.msra.mxu0 %v472
        %576 = vmatprep.subr.mxu0 0.0
        %577 = vmatpush1.msra.mxu0 %v473
        %578 = vmatprep.subr.mxu0 0.0
        %579 = vmatpush1.msra.mxu0 %v474
        %580 = vmatprep.subr.mxu0 0.0
        %581 = vmatpush1.msra.mxu0 %v475
        %582 = vmatprep.subr.mxu0 0.0
        %583 = vmatpush1.msra.mxu0 %v476
        %584 = vmatprep.subr.mxu0 0.0
        %585 = vmatpush1.msra.mxu0 %v477
        %586 = vmatprep.subr.mxu0 0.0
        %587 = vmatpush1.msra.mxu0 %v478
        %588 = vmatprep.subr.mxu0 0.0
        %589 = vmatpush1.msra.mxu0 0.0
        %590 = vmatprep.subr.mxu0 0.0
        %591 = vmatpush1.msra.mxu0 0.0
        %592 = vmatprep.subr.mxu0 0.0
        %593 = vmatpush1.msra.mxu0 0.0
        %594 = vmatprep.subr.mxu0 0.0
        %595 = vmatpush1.msra.mxu0 0.0
        %596 = vmatprep.subr.mxu0 0.0
        %597 = vmatpush1.msra.mxu0 0.0
        %598 = vmatprep.subr.mxu0 0.0
        %599 = vmatpush1.msra.mxu0 0.0
        %600 = vmatprep.subr.mxu0 0.0
        %601 = vmatpush1.msra.mxu0 0.0
        %602 = vmatprep.subr.mxu0 0.0
        %603 = vmatpush1.msra.mxu0 0.0
        %604 = vmatprep.subr.mxu0 0.0
        %605 = vmatpush1.msra.mxu0 0.0
        %606 = vmatprep.subr.mxu0 0.0
        %607 = vmatpush1.msra.mxu0 0.0
        %608 = vmatprep.subr.mxu0 0.0
        %609 = vmatpush1.msra.mxu0 0.0
        %610 = vmatprep.subr.mxu0 0.0
        %611 = vmatpush1.msra.mxu0 0.0
        %612 = vmatprep.subr.mxu0 0.0
        %613 = vmatpush1.msra.mxu0 0.0
        %614 = vmatprep.subr.mxu0 0.0
        %615 = vmatpush1.msra.mxu0 0.0
        %616 = vmatprep.subr.mxu0 0.0
        %617 = vmatpush1.msra.mxu0 0.0
        %618 = vmatprep.subr.mxu0 0.0
        %619 = vmatpush1.msra.mxu0 0.0
        %620 = vmatprep.mubr.f32.mxu0 0.0
        %621 = vmatmul.mubr.f32.gmra.mrb[0].mxu0 %v430
        %v622 = vpop.f32.mrb[0].mxu0
        %v623 = vadd.f32 %v553, %v622
        %v624 = vpop.f32.mrb[0].mxu0
        %625 = vdwg.mxu0
        %v626 = vmax.f32 %v623, 0.0
        %627 = vst.msk [vmem:[%s215] sm:$0xff] %vm225, %v626
        %s628 = sand.u32 %s137, 1
        %s629 = scalar_lea.sflag [#allocation5], %s628
        %s630 = sand.u32 %s137, 1
        %s631 = smul.addr %s630, 8
        %s632 = scalar_lea.vmem [#allocation4], %s631
        // Predicated region
        $region41: #{simple_conv_block.1} parent=39 // pred_check
          %p633 = pneg %p147
        $region42: #{simple_conv_block.1} parent=39 // pred_check_branch
          %635 = sbr.rel (%p633) target = $region44
        $region43: #{simple_conv_block.1} parent=39 // pred_region
          %s637 = ssub.s32 128, 128
          %638 = vsyncadd %s629, %s637
          %s639 = smul.addr %s19, 128
          %s640 = scalar_lea.hbm %s5, %s639
          %s642 = sshll.u32 %s632, 4
          %s643 = int_to_ptr.vmem [resolvable:$true] %s642
          %645 = dma.vmem_to_hbm [thread:$0]  %s643, 128, %s640, %s629
        $region44: #{simple_conv_block.1} parent=39 // pred_fallthru
          _
      $region40: #{simple_conv_block.1} parent=5 // pred_fallthru
        _
      %p646 = scmp.le.s32.totalorder 2, %s14
      // Predicated region
      $region45: #{simple_conv_block.1} parent=5 // pred_check
        %p647 = pneg %p646
      $region46: #{simple_conv_block.1} parent=5 // pred_check_branch
        %649 = sbr.rel (%p647) target = $region48
      $region47: #{simple_conv_block.1} parent=5 // pred_region
        %s650 = ssub.s32 %s14, 2
        // Predicated region
        $region49: #{simple_conv_block.1} parent=47 // pred_check
          %p651 = pneg %p153
        $region50: #{simple_conv_block.1} parent=47 // pred_check_branch
          %653 = sbr.rel (%p651) target = $region52
        $region51: #{simple_conv_block.1} parent=47 // pred_region
          %s654 = sand.u32 %s138, 1
          %s655 = scalar_lea.sflag [#allocation5], %s654
          %s656 = sand.u32 %s138, 1
          %s657 = smul.addr %s656, 8
          %s658 = scalar_lea.vmem [#allocation4], %s657
          %659 = dma.done %s655, 128
        $region52: #{simple_conv_block.1} parent=47 // pred_fallthru
          _
      $region48: #{simple_conv_block.1} parent=5 // pred_fallthru
        _
    $region6: #{simple_conv_block.1} parent=1 // loop_footer
      %s18 = sadd.s32 1, %s14
    $region7: #{simple_conv_block.1} parent=1 // loop_footer_branch
      %13 = sbr.rel target = $region3
    $region8: #{simple_conv_block.1} parent=1 // loop_exit
      _
    %660 = vsyncpa [#allocation5], 1
    %s661 = scalar_lea.sflag [#allocation5], 1
    %662 = vsyncpa %s661, 1

</llo_original>
